<compile_context>
chip_gen: v7x
topology: tpu7x:2x2x1
jax: 0.10.0
libtpu: 0.0.40
codegen_flags: <defaults>
</compile_context>

<pallas_src>
import math

import jax
import jax.numpy as jnp
from jax.experimental import pallas as pl
from jax.experimental.pallas import tpu as pltpu  # noqa: F401  (TPU backend assumed)

# ---------------- config (small shapes consistent with the module) ----------------
B, CIN, L = 2, 4, 16          # batch, input_dims, sequence length
D, HEAD = 32, 4               # dims, head (head only defines head_dim; unused in forward)
K1 = 3                        # first conv kernel_size (config), padding = K1 // 2
STRIDE = 1                    # config default
EPS = 1e-8                    # RMSNorm eps
INV_SQRT2 = 1.0 / math.sqrt(2.0)


def sinusoids_jax(length, channels, max_timescale=10000.0):
    """JAX mirror of the module's sinusoids() positional embedding."""
    assert channels % 2 == 0
    log_inc = math.log(max_timescale) / (channels // 2 - 1)
    inv_ts = jnp.exp(-log_inc * jnp.arange(channels // 2, dtype=jnp.float32))
    scaled = jnp.arange(length, dtype=jnp.float32)[:, None] * inv_ts[None, :]
    return jnp.concatenate([jnp.sin(scaled), jnp.cos(scaled)], axis=1)   # (length, channels)


# ---------------- Pallas kernel ----------------
def encoder_kernel(x_ref, w1_ref, w2_ref, w3_ref, b_ref, pos_ref, o_ref):
    # x_ref: (B, L, Cin)   time on sublanes, channels on lanes
    x = x_ref[...]

    def gelu(h):  # exact (erf) GELU == nn.GELU()
        return 0.5 * h * (1.0 + jax.lax.erf(h * INV_SQRT2))

    def conv1d_same(h3, w_taps, bias_2d):
        """Dense 'same' conv1d as K shifted tap-matmuls on the MXU.
        h3: (B, L, Cin); w_taps ref: (K, Cin, Cout); bias_2d: (1, Cout)."""
        K, cin, cout = w_taps.shape
        pad = K // 2
        Bb, Ll, _ = h3.shape
        z = jnp.zeros((Bb, pad, cin), jnp.float32)
        hp = jnp.concatenate([z, h3, z], axis=1)               # (B, L + 2*pad, Cin)
        acc = jnp.zeros((Bb * Ll, cout), jnp.float32) + bias_2d
        for k in range(K):                                     # static unroll, K in {3, 5}
            hk = hp[:, k:k + Ll, :].reshape(Bb * Ll, cin)      # shifted rows, all B*L at once
            acc = acc + jnp.dot(hk, w_taps[k], preferred_element_type=jnp.float32)
        return acc.reshape(Bb, Ll, cout)

    def dwconv1d_same(h3, w_taps, bias_2d):
        """Depthwise (groups=dims) 'same' conv1d on the VPU (no MXU pushes).
        h3: (B, L, C); w_taps ref: (K, C); bias_2d: (1, C)."""
        K, c = w_taps.shape
        pad = K // 2
        Bb, Ll, _ = h3.shape
        z = jnp.zeros((Bb, pad, c), jnp.float32)
        hp = jnp.concatenate([z, h3, z], axis=1)
        acc = jnp.zeros((Bb, Ll, c), jnp.float32) + bias_2d[None]
        for k in range(K):                                     # static unroll, K = 3
            acc = acc + hp[:, k:k + Ll, :] * w_taps[k:k + 1, :][None]
        return acc

    h = gelu(conv1d_same(x, w1_ref, b_ref[0:1, :]))            # Conv1d(Cin -> D, k=K1)
    h = gelu(conv1d_same(h, w2_ref, b_ref[1:2, :]))            # Conv1d(D -> D, k=5)
    h = gelu(dwconv1d_same(h, w3_ref, b_ref[2:3, :]))          # depthwise Conv1d(D, k=3)

    # permute(0,2,1) already folded into the (B, L, D) layout; add positional embedding
    h = h + pos_ref[...][None, :, :]

    # TODO(synk): dropout(p=0.1) is training-only noise; inference forward is identity here.

    # RMSNorm (_norm): elementwise_affine weight == ones, eps = 1e-8
    ms = jnp.mean(h * h, axis=-1, keepdims=True)
    o_ref[...] = h * jax.lax.rsqrt(ms + EPS)


# ---------------- wrapper ----------------
def feature_encoder_forward(x_bcl, w1, b1, w2, b2, w3, b3):
    """x_bcl: (B, input_dims, L) like the PyTorch module. Weights in PyTorch Conv1d layout:
    w1 (D, CIN, K1), w2 (D, D, 5), w3 (D, 1, 3) [depthwise], biases (D,)."""
    Bb, _, Ll = x_bcl.shape
    # layout plumbing outside the kernel (one-time host/XLA transposes)
    x_bld = jnp.transpose(x_bcl, (0, 2, 1)).astype(jnp.float32)   # (B, L, Cin)
    w1_taps = jnp.transpose(w1, (2, 1, 0)).astype(jnp.float32)    # (K1, Cin, D)
    w2_taps = jnp.transpose(w2, (2, 1, 0)).astype(jnp.float32)    # (5, D, D)
    w3_taps = jnp.transpose(w3[:, 0, :], (1, 0)).astype(jnp.float32)  # (3, D)
    biases = jnp.stack([b1, b2, b3], axis=0).astype(jnp.float32)  # (3, D) packed biases
    pos = sinusoids_jax(Ll, D)                                    # (L, D)  (stride=1 => L_out = L)

    # No grid: single invocation, full arrays resident in VMEM (default whole-array blocks).
    return pl.pallas_call(
        encoder_kernel,
        out_shape=jax.ShapeDtypeStruct((Bb, Ll, D), jnp.float32),
    )(x_bld, w1_taps, w2_taps, w3_taps, biases, pos)


# ---------------- pure-JAX reference (mirrors the PyTorch code path) ----------------
def reference(x_bcl, w1, b1, w2, b2, w3, b3):
    def conv1d(h, w, b, pad, groups=1):
        out = jax.lax.conv_general_dilated(
            h, w, window_strides=(1,), padding=[(pad, pad)],
            dimension_numbers=('NCH', 'OIH', 'NCH'),
            feature_group_count=groups)
        return out + b[None, :, None]

    def gelu(h):
        return 0.5 * h * (1.0 + jax.lax.erf(h * INV_SQRT2))

    h = gelu(conv1d(x_bcl, w1, b1, K1 // 2))
    h = gelu(conv1d(h, w2, b2, 2))
    h = gelu(conv1d(h, w3, b3, 1, groups=D))
    h = jnp.transpose(h, (0, 2, 1))                       # (B, L, D)
    h = h + sinusoids_jax(h.shape[1], D)[None]
    # dropout: identity at inference
    ms = jnp.mean(h * h, axis=-1, keepdims=True)
    return h * jax.lax.rsqrt(ms + EPS)


# ---------------- deterministic parameter init & run ----------------
if __name__ == "__main__":
    key = jax.random.PRNGKey(0)
    ks = jax.random.split(key, 4)

    def conv_init(k, cout, cin_per_group, ksz):           # torch Conv1d-style uniform init
        bound = 1.0 / math.sqrt(cin_per_group * ksz)
        kw, kb = jax.random.split(k)
        w = jax.random.uniform(kw, (cout, cin_per_group, ksz), jnp.float32, -bound, bound)
        b = jax.random.uniform(kb, (cout,), jnp.float32, -bound, bound)
        return w, b

    w1, b1 = conv_init(ks[0], D, CIN, K1)                 # Conv1d(input_dims, dims, k=3)
    w2, b2 = conv_init(ks[1], D, D, 5)                    # Conv1d(dims, dims, k=5)
    w3, b3 = conv_init(ks[2], D, 1, 3)                    # Conv1d(dims, dims, k=3, groups=dims)
    x = jax.random.normal(ks[3], (B, CIN, L), jnp.float32)

    out = feature_encoder_forward(x, w1, b1, w2, b2, w3, b3)
    out = jax.block_until_ready(out)

    ref = reference(x, w1, b1, w2, b2, w3, b3)
    assert out.shape == (B, L, D) and out.dtype == jnp.float32
    assert jnp.allclose(out, ref, rtol=1e-4, atol=1e-4), \
        f"kernel/reference mismatch, max abs err {float(jnp.max(jnp.abs(out - ref)))}"

    # TODO(synk): only the default config path is implemented (act='gelu', stride=1);
    # training-mode dropout and other activation choices are untaken branches here.
    print("KERNEL_OK")
</pallas_src>

<mosaic_0001>
module attributes {stable_mosaic.version = 11 : i64} {
  func.func @encoder_kernel(%arg0: memref<2x16x4xf32, #tpu.memory_space<vmem>>, %arg1: memref<3x4x32xf32, #tpu.memory_space<vmem>>, %arg2: memref<5x32x32xf32, #tpu.memory_space<vmem>>, %arg3: memref<3x32xf32, #tpu.memory_space<vmem>>, %arg4: memref<3x32xf32, #tpu.memory_space<vmem>>, %arg5: memref<16x32xf32, #tpu.memory_space<vmem>>, %arg6: memref<2x16x32xf32, #tpu.memory_space<vmem>>) attributes {dimension_semantics = [], scalar_prefetch = 0 : i64, scratch_operands = 0 : i64, tpu.core_type = #tpu.core_type<tc>} {
    %c0 = arith.constant 0 : index
    %c0_0 = arith.constant 0 : index
    %c0_1 = arith.constant 0 : index
    %0 = vector.load %arg0[%c0, %c0_0, %c0_1] : memref<2x16x4xf32, #tpu.memory_space<vmem>>, vector<2x16x4xf32>
    %c0_2 = arith.constant 0 : index
    %c0_3 = arith.constant 0 : index
    %1 = vector.load %arg4[%c0_2, %c0_3] : memref<3x32xf32, #tpu.memory_space<vmem>>, vector<1x32xf32>
    %cst = arith.constant 0.000000e+00 : f32
    %2 = vector.broadcast %cst : f32 to vector<2x1x4xf32>
    %3 = tpu.concatenate %2, %0, %2 in 1 : vector<2x1x4xf32>, vector<2x16x4xf32>, vector<2x1x4xf32> -> vector<2x18x4xf32>
    %cst_4 = arith.constant 0.000000e+00 : f32
    %4 = vector.broadcast %cst_4 : f32 to vector<32x32xf32>
    %5 = vector.broadcast %1 : vector<1x32xf32> to vector<32x32xf32>
    %6 = arith.addf %4, %5 : vector<32x32xf32>
    %7 = vector.extract_strided_slice %3 {offsets = [0, 0, 0], sizes = [2, 16, 4], strides = [1, 1, 1]} : vector<2x18x4xf32> to vector<2x16x4xf32>
    %8 = vector.shape_cast %7 : vector<2x16x4xf32> to vector<32x4xf32>
    %c0_5 = arith.constant 0 : index
    %c0_6 = arith.constant 0 : index
    %c0_7 = arith.constant 0 : index
    %9 = vector.load %arg1[%c0_5, %c0_6, %c0_7] : memref<3x4x32xf32, #tpu.memory_space<vmem>>, vector<1x4x32xf32>
    %10 = vector.shape_cast %9 : vector<1x4x32xf32> to vector<4x32xf32>
    %cst_8 = arith.constant dense<0.000000e+00> : vector<32x32xf32>
    %11 = tpu.matmul %8, %10, %cst_8 {dimension_numbers = #tpu.dot_dimension_numbers<[1], [0], [0], [1], [0, 0, 1, 1], [], []>} : vector<32x4xf32>, vector<4x32xf32>, vector<32x32xf32> -> vector<32x32xf32>
    %12 = arith.addf %6, %11 : vector<32x32xf32>
    %13 = vector.extract_strided_slice %3 {offsets = [0, 1, 0], sizes = [2, 16, 4], strides = [1, 1, 1]} : vector<2x18x4xf32> to vector<2x16x4xf32>
    %14 = vector.shape_cast %13 : vector<2x16x4xf32> to vector<32x4xf32>
    %c1 = arith.constant 1 : index
    %c0_9 = arith.constant 0 : index
    %c0_10 = arith.constant 0 : index
    %15 = vector.load %arg1[%c1, %c0_9, %c0_10] : memref<3x4x32xf32, #tpu.memory_space<vmem>>, vector<1x4x32xf32>
    %16 = vector.shape_cast %15 : vector<1x4x32xf32> to vector<4x32xf32>
    %cst_11 = arith.constant dense<0.000000e+00> : vector<32x32xf32>
    %17 = tpu.matmul %14, %16, %cst_11 {dimension_numbers = #tpu.dot_dimension_numbers<[1], [0], [0], [1], [0, 0, 1, 1], [], []>} : vector<32x4xf32>, vector<4x32xf32>, vector<32x32xf32> -> vector<32x32xf32>
    %18 = arith.addf %12, %17 : vector<32x32xf32>
    %19 = vector.extract_strided_slice %3 {offsets = [0, 2, 0], sizes = [2, 16, 4], strides = [1, 1, 1]} : vector<2x18x4xf32> to vector<2x16x4xf32>
    %20 = vector.shape_cast %19 : vector<2x16x4xf32> to vector<32x4xf32>
    %c2 = arith.constant 2 : index
    %c0_12 = arith.constant 0 : index
    %c0_13 = arith.constant 0 : index
    %21 = vector.load %arg1[%c2, %c0_12, %c0_13] : memref<3x4x32xf32, #tpu.memory_space<vmem>>, vector<1x4x32xf32>
    %22 = vector.shape_cast %21 : vector<1x4x32xf32> to vector<4x32xf32>
    %cst_14 = arith.constant dense<0.000000e+00> : vector<32x32xf32>
    %23 = tpu.matmul %20, %22, %cst_14 {dimension_numbers = #tpu.dot_dimension_numbers<[1], [0], [0], [1], [0, 0, 1, 1], [], []>} : vector<32x4xf32>, vector<4x32xf32>, vector<32x32xf32> -> vector<32x32xf32>
    %24 = arith.addf %18, %23 : vector<32x32xf32>
    %25 = vector.shape_cast %24 : vector<32x32xf32> to vector<2x16x32xf32>
    %cst_15 = arith.constant 5.000000e-01 : f32
    %26 = vector.broadcast %cst_15 : f32 to vector<2x16x32xf32>
    %27 = arith.mulf %26, %25 : vector<2x16x32xf32>
    %cst_16 = arith.constant 0.707106769 : f32
    %28 = vector.broadcast %cst_16 : f32 to vector<2x16x32xf32>
    %29 = arith.mulf %25, %28 : vector<2x16x32xf32>
    %30 = math.erf %29 : vector<2x16x32xf32>
    %cst_17 = arith.constant 1.000000e+00 : f32
    %31 = vector.broadcast %cst_17 : f32 to vector<2x16x32xf32>
    %32 = arith.addf %31, %30 : vector<2x16x32xf32>
    %33 = arith.mulf %27, %32 : vector<2x16x32xf32>
    %c1_18 = arith.constant 1 : index
    %c0_19 = arith.constant 0 : index
    %34 = vector.load %arg4[%c1_18, %c0_19] : memref<3x32xf32, #tpu.memory_space<vmem>>, vector<1x32xf32>
    %cst_20 = arith.constant 0.000000e+00 : f32
    %35 = vector.broadcast %cst_20 : f32 to vector<2x2x32xf32>
    %36 = tpu.concatenate %35, %33, %35 in 1 : vector<2x2x32xf32>, vector<2x16x32xf32>, vector<2x2x32xf32> -> vector<2x20x32xf32>
    %cst_21 = arith.constant 0.000000e+00 : f32
    %37 = vector.broadcast %cst_21 : f32 to vector<32x32xf32>
    %38 = vector.broadcast %34 : vector<1x32xf32> to vector<32x32xf32>
    %39 = arith.addf %37, %38 : vector<32x32xf32>
    %40 = vector.extract_strided_slice %36 {offsets = [0, 0, 0], sizes = [2, 16, 32], strides = [1, 1, 1]} : vector<2x20x32xf32> to vector<2x16x32xf32>
    %41 = vector.shape_cast %40 : vector<2x16x32xf32> to vector<32x32xf32>
    %c0_22 = arith.constant 0 : index
    %c0_23 = arith.constant 0 : index
    %c0_24 = arith.constant 0 : index
    %42 = vector.load %arg2[%c0_22, %c0_23, %c0_24] : memref<5x32x32xf32, #tpu.memory_space<vmem>>, vector<1x32x32xf32>
    %43 = vector.shape_cast %42 : vector<1x32x32xf32> to vector<32x32xf32>
    %cst_25 = arith.constant dense<0.000000e+00> : vector<32x32xf32>
    %44 = tpu.matmul %41, %43, %cst_25 {dimension_numbers = #tpu.dot_dimension_numbers<[1], [0], [0], [1], [0, 0, 1, 1], [], []>} : vector<32x32xf32>, vector<32x32xf32>, vector<32x32xf32> -> vector<32x32xf32>
    %45 = arith.addf %39, %44 : vector<32x32xf32>
    %46 = vector.extract_strided_slice %36 {offsets = [0, 1, 0], sizes = [2, 16, 32], strides = [1, 1, 1]} : vector<2x20x32xf32> to vector<2x16x32xf32>
    %47 = vector.shape_cast %46 : vector<2x16x32xf32> to vector<32x32xf32>
    %c1_26 = arith.constant 1 : index
    %c0_27 = arith.constant 0 : index
    %c0_28 = arith.constant 0 : index
    %48 = vector.load %arg2[%c1_26, %c0_27, %c0_28] : memref<5x32x32xf32, #tpu.memory_space<vmem>>, vector<1x32x32xf32>
    %49 = vector.shape_cast %48 : vector<1x32x32xf32> to vector<32x32xf32>
    %cst_29 = arith.constant dense<0.000000e+00> : vector<32x32xf32>
    %50 = tpu.matmul %47, %49, %cst_29 {dimension_numbers = #tpu.dot_dimension_numbers<[1], [0], [0], [1], [0, 0, 1, 1], [], []>} : vector<32x32xf32>, vector<32x32xf32>, vector<32x32xf32> -> vector<32x32xf32>
    %51 = arith.addf %45, %50 : vector<32x32xf32>
    %52 = vector.extract_strided_slice %36 {offsets = [0, 2, 0], sizes = [2, 16, 32], strides = [1, 1, 1]} : vector<2x20x32xf32> to vector<2x16x32xf32>
    %53 = vector.shape_cast %52 : vector<2x16x32xf32> to vector<32x32xf32>
    %c2_30 = arith.constant 2 : index
    %c0_31 = arith.constant 0 : index
    %c0_32 = arith.constant 0 : index
    %54 = vector.load %arg2[%c2_30, %c0_31, %c0_32] : memref<5x32x32xf32, #tpu.memory_space<vmem>>, vector<1x32x32xf32>
    %55 = vector.shape_cast %54 : vector<1x32x32xf32> to vector<32x32xf32>
    %cst_33 = arith.constant dense<0.000000e+00> : vector<32x32xf32>
    %56 = tpu.matmul %53, %55, %cst_33 {dimension_numbers = #tpu.dot_dimension_numbers<[1], [0], [0], [1], [0, 0, 1, 1], [], []>} : vector<32x32xf32>, vector<32x32xf32>, vector<32x32xf32> -> vector<32x32xf32>
    %57 = arith.addf %51, %56 : vector<32x32xf32>
    %58 = vector.extract_strided_slice %36 {offsets = [0, 3, 0], sizes = [2, 16, 32], strides = [1, 1, 1]} : vector<2x20x32xf32> to vector<2x16x32xf32>
    %59 = vector.shape_cast %58 : vector<2x16x32xf32> to vector<32x32xf32>
    %c3 = arith.constant 3 : index
    %c0_34 = arith.constant 0 : index
    %c0_35 = arith.constant 0 : index
    %60 = vector.load %arg2[%c3, %c0_34, %c0_35] : memref<5x32x32xf32, #tpu.memory_space<vmem>>, vector<1x32x32xf32>
    %61 = vector.shape_cast %60 : vector<1x32x32xf32> to vector<32x32xf32>
    %cst_36 = arith.constant dense<0.000000e+00> : vector<32x32xf32>
    %62 = tpu.matmul %59, %61, %cst_36 {dimension_numbers = #tpu.dot_dimension_numbers<[1], [0], [0], [1], [0, 0, 1, 1], [], []>} : vector<32x32xf32>, vector<32x32xf32>, vector<32x32xf32> -> vector<32x32xf32>
    %63 = arith.addf %57, %62 : vector<32x32xf32>
    %64 = vector.extract_strided_slice %36 {offsets = [0, 4, 0], sizes = [2, 16, 32], strides = [1, 1, 1]} : vector<2x20x32xf32> to vector<2x16x32xf32>
    %65 = vector.shape_cast %64 : vector<2x16x32xf32> to vector<32x32xf32>
    %c4 = arith.constant 4 : index
    %c0_37 = arith.constant 0 : index
    %c0_38 = arith.constant 0 : index
    %66 = vector.load %arg2[%c4, %c0_37, %c0_38] : memref<5x32x32xf32, #tpu.memory_space<vmem>>, vector<1x32x32xf32>
    %67 = vector.shape_cast %66 : vector<1x32x32xf32> to vector<32x32xf32>
    %cst_39 = arith.constant dense<0.000000e+00> : vector<32x32xf32>
    %68 = tpu.matmul %65, %67, %cst_39 {dimension_numbers = #tpu.dot_dimension_numbers<[1], [0], [0], [1], [0, 0, 1, 1], [], []>} : vector<32x32xf32>, vector<32x32xf32>, vector<32x32xf32> -> vector<32x32xf32>
    %69 = arith.addf %63, %68 : vector<32x32xf32>
    %70 = vector.shape_cast %69 : vector<32x32xf32> to vector<2x16x32xf32>
    %cst_40 = arith.constant 5.000000e-01 : f32
    %71 = vector.broadcast %cst_40 : f32 to vector<2x16x32xf32>
    %72 = arith.mulf %71, %70 : vector<2x16x32xf32>
    %cst_41 = arith.constant 0.707106769 : f32
    %73 = vector.broadcast %cst_41 : f32 to vector<2x16x32xf32>
    %74 = arith.mulf %70, %73 : vector<2x16x32xf32>
    %75 = math.erf %74 : vector<2x16x32xf32>
    %cst_42 = arith.constant 1.000000e+00 : f32
    %76 = vector.broadcast %cst_42 : f32 to vector<2x16x32xf32>
    %77 = arith.addf %76, %75 : vector<2x16x32xf32>
    %78 = arith.mulf %72, %77 : vector<2x16x32xf32>
    %c2_43 = arith.constant 2 : index
    %c0_44 = arith.constant 0 : index
    %79 = vector.load %arg4[%c2_43, %c0_44] : memref<3x32xf32, #tpu.memory_space<vmem>>, vector<1x32xf32>
    %cst_45 = arith.constant 0.000000e+00 : f32
    %80 = vector.broadcast %cst_45 : f32 to vector<2x1x32xf32>
    %81 = tpu.concatenate %80, %78, %80 in 1 : vector<2x1x32xf32>, vector<2x16x32xf32>, vector<2x1x32xf32> -> vector<2x18x32xf32>
    %cst_46 = arith.constant 0.000000e+00 : f32
    %82 = vector.broadcast %cst_46 : f32 to vector<2x16x32xf32>
    %83 = vector.shape_cast %79 : vector<1x32xf32> to vector<1x1x32xf32>
    %84 = vector.broadcast %83 : vector<1x1x32xf32> to vector<2x16x32xf32>
    %85 = arith.addf %82, %84 : vector<2x16x32xf32>
    %86 = vector.extract_strided_slice %81 {offsets = [0, 0, 0], sizes = [2, 16, 32], strides = [1, 1, 1]} : vector<2x18x32xf32> to vector<2x16x32xf32>
    %c0_47 = arith.constant 0 : index
    %c0_48 = arith.constant 0 : index
    %87 = vector.load %arg3[%c0_47, %c0_48] : memref<3x32xf32, #tpu.memory_space<vmem>>, vector<1x32xf32>
    %88 = vector.shape_cast %87 : vector<1x32xf32> to vector<1x1x32xf32>
    %89 = vector.broadcast %88 : vector<1x1x32xf32> to vector<2x16x32xf32>
    %90 = arith.mulf %86, %89 : vector<2x16x32xf32>
    %91 = arith.addf %85, %90 : vector<2x16x32xf32>
    %92 = vector.extract_strided_slice %81 {offsets = [0, 1, 0], sizes = [2, 16, 32], strides = [1, 1, 1]} : vector<2x18x32xf32> to vector<2x16x32xf32>
    %c1_49 = arith.constant 1 : index
    %c0_50 = arith.constant 0 : index
    %93 = vector.load %arg3[%c1_49, %c0_50] : memref<3x32xf32, #tpu.memory_space<vmem>>, vector<1x32xf32>
    %94 = vector.shape_cast %93 : vector<1x32xf32> to vector<1x1x32xf32>
    %95 = vector.broadcast %94 : vector<1x1x32xf32> to vector<2x16x32xf32>
    %96 = arith.mulf %92, %95 : vector<2x16x32xf32>
    %97 = arith.addf %91, %96 : vector<2x16x32xf32>
    %98 = vector.extract_strided_slice %81 {offsets = [0, 2, 0], sizes = [2, 16, 32], strides = [1, 1, 1]} : vector<2x18x32xf32> to vector<2x16x32xf32>
    %c2_51 = arith.constant 2 : index
    %c0_52 = arith.constant 0 : index
    %99 = vector.load %arg3[%c2_51, %c0_52] : memref<3x32xf32, #tpu.memory_space<vmem>>, vector<1x32xf32>
    %100 = vector.shape_cast %99 : vector<1x32xf32> to vector<1x1x32xf32>
    %101 = vector.broadcast %100 : vector<1x1x32xf32> to vector<2x16x32xf32>
    %102 = arith.mulf %98, %101 : vector<2x16x32xf32>
    %103 = arith.addf %97, %102 : vector<2x16x32xf32>
    %cst_53 = arith.constant 5.000000e-01 : f32
    %104 = vector.broadcast %cst_53 : f32 to vector<2x16x32xf32>
    %105 = arith.mulf %104, %103 : vector<2x16x32xf32>
    %cst_54 = arith.constant 0.707106769 : f32
    %106 = vector.broadcast %cst_54 : f32 to vector<2x16x32xf32>
    %107 = arith.mulf %103, %106 : vector<2x16x32xf32>
    %108 = math.erf %107 : vector<2x16x32xf32>
    %cst_55 = arith.constant 1.000000e+00 : f32
    %109 = vector.broadcast %cst_55 : f32 to vector<2x16x32xf32>
    %110 = arith.addf %109, %108 : vector<2x16x32xf32>
    %111 = arith.mulf %105, %110 : vector<2x16x32xf32>
    %c0_56 = arith.constant 0 : index
    %c0_57 = arith.constant 0 : index
    %112 = vector.load %arg5[%c0_56, %c0_57] : memref<16x32xf32, #tpu.memory_space<vmem>>, vector<16x32xf32>
    %113 = vector.shape_cast %112 : vector<16x32xf32> to vector<1x16x32xf32>
    %114 = vector.broadcast %113 : vector<1x16x32xf32> to vector<2x16x32xf32>
    %115 = arith.addf %111, %114 : vector<2x16x32xf32>
    %116 = arith.mulf %115, %115 : vector<2x16x32xf32>
    %cst_58 = arith.constant dense<0.000000e+00> : vector<2x16xf32>
    %117 = vector.multi_reduction <add>, %116, %cst_58 [2] : vector<2x16x32xf32> to vector<2x16xf32>
    %118 = vector.shape_cast %117 : vector<2x16xf32> to vector<2x16x1xf32>
    %cst_59 = arith.constant 3.200000e+01 : f32
    %119 = vector.broadcast %cst_59 : f32 to vector<2x16x1xf32>
    %120 = arith.divf %118, %119 : vector<2x16x1xf32>
    %cst_60 = arith.constant 9.99999993E-9 : f32
    %121 = vector.broadcast %cst_60 : f32 to vector<2x16x1xf32>
    %122 = arith.addf %120, %121 : vector<2x16x1xf32>
    %123 = math.rsqrt %122 : vector<2x16x1xf32>
    %124 = vector.broadcast %123 : vector<2x16x1xf32> to vector<2x16x32xf32>
    %125 = arith.mulf %115, %124 : vector<2x16x32xf32>
    %c0_61 = arith.constant 0 : index
    %c0_62 = arith.constant 0 : index
    %c0_63 = arith.constant 0 : index
    %126 = vector.load %arg6[%c0_61, %c0_62, %c0_63] : memref<2x16x32xf32, #tpu.memory_space<vmem>>, vector<2x16x32xf32>
    tpu.vector_store %arg6[%c0_61, %c0_62, %c0_63], %125 {strides = array<i32>} : memref<2x16x32xf32, #tpu.memory_space<vmem>>, vector<2x16x32xf32>,
    return
  }
}

</mosaic_0001>

<llo_original>
// kernel: tpu_custom_call.1
$region0: #{tpu_custom_call.1}
  #allocation0 [shape = 'u32[]', space=smem, size = 0x4, offset = 0x4, fixed_abs, tag = 'smem constant byte address 0x4 - core index']
  #allocation1 [shape = 'u32[144,128]{1,0:T(1,128)}', space=vmem, size = 0x12000, scoped, tag = 'internal scratch']
  %s0 = inlined_call_operand.vmem [shape: f32[2,16,4], index: 0, kind: input, shape index: {}]
  %s1 = inlined_call_operand.vmem [shape: f32[3,4,32], index: 1, kind: input, shape index: {}]
  %s2 = inlined_call_operand.hbm [shape: f32[5,32,32], index: 2, kind: input, shape index: {}]
  %s3 = inlined_call_operand.vmem [shape: f32[3,32], index: 3, kind: input, shape index: {}]
  %s4 = inlined_call_operand.vmem [shape: f32[3,32], index: 4, kind: input, shape index: {}]
  %s5 = inlined_call_operand.vmem [shape: f32[16,32], index: 5, kind: input, shape index: {}]
  %s6 = inlined_call_operand.hbm [shape: f32[2,16,32], index: 6, kind: output, shape index: {}]
  %s7 = sld [smem:[#allocation0]]
  $region38: #{tpu_custom_call.1} parent=0
    _
  %s9 = ssub.s32 1, %s7
  %s10 = scalar_select 0, %s9, %s7
  $region1: #{tpu_custom_call.1} parent=0
    #allocation2 [shape = 'u8[81920]{0}', space=vmem, size = 0x14000, scoped, tag = 'input window, operand 2, single buffered']
    #allocation3 [shape = 's32[1]{0}', space=sflag, size = 0x4, scoped, tag = 'scoped memory for tpu_custom_call.1']
    #allocation4 [shape = 's32[1]{0}', space=sflag, size = 0x4, scoped, tag = 'scoped memory for tpu_custom_call.1']
    #allocation5 [shape = 'u8[16384]{0}', space=vmem, size = 0x4000, scoped, tag = 'output window, operand 0, single buffered']
    %11 = vsyncpa [#allocation3], 0
    %12 = vsyncpa [#allocation4], 0
    // Predicated region
    $region2: #{tpu_custom_call.1} parent=1 // pred_check
      _
    $region3: #{tpu_custom_call.1} parent=1 // pred_check_branch
      %14 = sbr.rel (0) target = $region5
    $region4: #{tpu_custom_call.1} parent=1 // pred_region
      _
    $region5: #{tpu_custom_call.1} parent=1 // pred_fallthru
      _
    // Predicated region
    $region6: #{tpu_custom_call.1} parent=1 // pred_check
      _
    $region7: #{tpu_custom_call.1} parent=1 // pred_check_branch
      %16 = sbr.rel (0) target = $region9
    $region8: #{tpu_custom_call.1} parent=1 // pred_region
      _
    $region9: #{tpu_custom_call.1} parent=1 // pred_fallthru
      _
    // Predicated region
    $region10: #{tpu_custom_call.1} parent=1 // pred_check
      _
    $region11: #{tpu_custom_call.1} parent=1 // pred_check_branch
      %18 = sbr.rel (0) target = $region13
    $region12: #{tpu_custom_call.1} parent=1 // pred_region
      %s20 = ssub.s32 2560, 2560
      %21 = vsyncadd [#allocation3], %s20
      %s22 = sshll.u32 [#allocation2], 4
      %s23 = int_to_ptr.vmem [resolvable:$true] %s22
      %28 = dma.hbm_to_vmem [thread:$0]  %s2, 2560, %s23, [#allocation3], 128, 128, 8
    $region13: #{tpu_custom_call.1} parent=1 // pred_fallthru
      _
    // Predicated region
    $region14: #{tpu_custom_call.1} parent=1 // pred_check
      _
    $region15: #{tpu_custom_call.1} parent=1 // pred_check_branch
      %30 = sbr.rel (0) target = $region17
    $region16: #{tpu_custom_call.1} parent=1 // pred_region
      _
    $region17: #{tpu_custom_call.1} parent=1 // pred_fallthru
      _
    // Predicated region
    $region18: #{tpu_custom_call.1} parent=1 // pred_check
      _
    $region19: #{tpu_custom_call.1} parent=1 // pred_check_branch
      %32 = sbr.rel (0) target = $region21
    $region20: #{tpu_custom_call.1} parent=1 // pred_region
      _
    $region21: #{tpu_custom_call.1} parent=1 // pred_fallthru
      _
    // Predicated region
    $region22: #{tpu_custom_call.1} parent=1 // pred_check
      _
    $region23: #{tpu_custom_call.1} parent=1 // pred_check_branch
      %34 = sbr.rel (0) target = $region25
    $region24: #{tpu_custom_call.1} parent=1 // pred_region
      _
    $region25: #{tpu_custom_call.1} parent=1 // pred_fallthru
      _
    // Predicated region
    $region26: #{tpu_custom_call.1} parent=1 // pred_check
      _
    $region27: #{tpu_custom_call.1} parent=1 // pred_check_branch
      %36 = sbr.rel (0) target = $region29
    $region28: #{tpu_custom_call.1} parent=1 // pred_region
      %37 = dma.done [#allocation3], 2560
    $region29: #{tpu_custom_call.1} parent=1 // pred_fallthru
      _
    %v38 = vld [vmem:[%s0] sm:$0xff]
    %v39 = vld [vmem:[%s0 + $0x8] sm:$0xff]
    %v40 = vld [vmem:[%s0 + $0x10] sm:$0xff]
    %v41 = vld [vmem:[%s0 + $0x18] sm:$0xff]
    %v42 = vld [vmem:[%s4] sm:$0x1]
    %vm47 = vcmask 1040384
    %v48 = vrot.slane %v38, 7
    %v49 = vrot.slane %v39, 7
    %v50 = vsel %vm47, %v48, %v49
    %v51 = vrot.slane %v40, 7
    %v52 = vrot.slane %v41, 7
    %v53 = vsel %vm47, %v51, %v52
    %v58 = vsel %vm47, 0.0, %v48
    %v59 = vsel %vm47, 0.0, %v51
    %v60 = vsel %vm47, %v49, 0.0
    %v61 = vsel %vm47, %v52, 0.0
    %v62 = vlaneseq
    %v63 = vshrl.u32 %v62, 7
    %v64 = vsub.s32 0, %v63
    %v65 = vrot.slane %v42, %v64
    %v66 = vadd.f32 %v65, 0.0
    %v67 = vld [vmem:[%s1] sm:$0xf]
    %vm68 = vcmask 31744
    %v70 = vsel %vm68, %v58, 0
    %v72 = vsel %vm68, %v50, 0
    %v75 = vsel %vm68, %v59, 0
    %v77 = vsel %vm68, %v53, 0
    %vm79 = vcmask 1043456
    %v81 = vsel %vm79, %v67, 0
    %83 = vmatprep.subr.mxu0 0.0
    %84 = vmatpush1.msra.mxu0 %v81
    %85 = vmatprep.subr.mxu0 0.0
    %86 = vmatpush1.msra.mxu0 0.0
    %87 = vmatprep.subr.mxu0 0.0
    %88 = vmatpush1.msra.mxu0 0.0
    %89 = vmatprep.subr.mxu0 0.0
    %90 = vmatpush1.msra.mxu0 0.0
    %91 = vmatprep.subr.mxu0 0.0
    %92 = vmatpush1.msra.mxu0 0.0
    %93 = vmatprep.subr.mxu0 0.0
    %94 = vmatpush1.msra.mxu0 0.0
    %95 = vmatprep.subr.mxu0 0.0
    %96 = vmatpush1.msra.mxu0 0.0
    %97 = vmatprep.subr.mxu0 0.0
    %98 = vmatpush1.msra.mxu0 0.0
    %99 = vmatprep.subr.mxu0 0.0
    %100 = vmatpush1.msra.mxu0 0.0
    %101 = vmatprep.subr.mxu0 0.0
    %102 = vmatpush1.msra.mxu0 0.0
    %103 = vmatprep.subr.mxu0 0.0
    %104 = vmatpush1.msra.mxu0 0.0
    %105 = vmatprep.subr.mxu0 0.0
    %106 = vmatpush1.msra.mxu0 0.0
    %107 = vmatprep.subr.mxu0 0.0
    %108 = vmatpush1.msra.mxu0 0.0
    %109 = vmatprep.subr.mxu0 0.0
    %110 = vmatpush1.msra.mxu0 0.0
    %111 = vmatprep.subr.mxu0 0.0
    %112 = vmatpush1.msra.mxu0 0.0
    %113 = vmatprep.subr.mxu0 0.0
    %114 = vmatpush1.msra.mxu0 0.0
    %115 = vmatprep.subr.mxu0 0.0
    %116 = vmatpush1.msra.mxu0 0.0
    %117 = vmatprep.subr.mxu0 0.0
    %118 = vmatpush1.msra.mxu0 0.0
    %119 = vmatprep.subr.mxu0 0.0
    %120 = vmatpush1.msra.mxu0 0.0
    %121 = vmatprep.subr.mxu0 0.0
    %122 = vmatpush1.msra.mxu0 0.0
    %123 = vmatprep.subr.mxu0 0.0
    %124 = vmatpush1.msra.mxu0 0.0
    %125 = vmatprep.subr.mxu0 0.0
    %126 = vmatpush1.msra.mxu0 0.0
    %127 = vmatprep.subr.mxu0 0.0
    %128 = vmatpush1.msra.mxu0 0.0
    %129 = vmatprep.subr.mxu0 0.0
    %130 = vmatpush1.msra.mxu0 0.0
    %131 = vmatprep.subr.mxu0 0.0
    %132 = vmatpush1.msra.mxu0 0.0
    %133 = vmatprep.subr.mxu0 0.0
    %134 = vmatpush1.msra.mxu0 0.0
    %135 = vmatprep.subr.mxu0 0.0
    %136 = vmatpush1.msra.mxu0 0.0
    %137 = vmatprep.subr.mxu0 0.0
    %138 = vmatpush1.msra.mxu0 0.0
    %139 = vmatprep.subr.mxu0 0.0
    %140 = vmatpush1.msra.mxu0 0.0
    %141 = vmatprep.subr.mxu0 0.0
    %142 = vmatpush1.msra.mxu0 0.0
    %143 = vmatprep.subr.mxu0 0.0
    %144 = vmatpush1.msra.mxu0 0.0
    %145 = vmatprep.subr.mxu0 0.0
    %146 = vmatpush1.msra.mxu0 0.0
    %147 = vmatprep.mubr.f32.mxu0 0.0
    %148 = vmatmul.mubr.f32.gmra.mrb[0].mxu0 %v70
    %v149 = vpop.f32.mrb[0].mxu0
    %v150 = vadd.f32 0.0, %v149
    %v151 = vpop.f32.mrb[0].mxu0
    %152 = vmatprep.mubr.f32.mxu0 0.0
    %153 = vmatmul.mubr.f32.gmra.mrb[0].mxu0 %v72
    %v154 = vpop.f32.mrb[0].mxu0
    %v155 = vadd.f32 0.0, %v154
    %v156 = vpop.f32.mrb[0].mxu0
    %157 = vmatprep.mubr.f32.mxu0 0.0
    %158 = vmatmul.mubr.f32.gmra.mrb[0].mxu0 %v75
    %v159 = vpop.f32.mrb[0].mxu0
    %v160 = vadd.f32 0.0, %v159
    %v161 = vpop.f32.mrb[0].mxu0
    %162 = vmatprep.mubr.f32.mxu0 0.0
    %163 = vmatmul.mubr.f32.gmra.mrb[0].mxu0 %v77
    %v164 = vpop.f32.mrb[0].mxu0
    %v165 = vadd.f32 0.0, %v164
    %v166 = vpop.f32.mrb[0].mxu0
    %167 = vdwg.mxu0
    %v168 = vadd.f32 %v66, %v150
    %v169 = vadd.f32 %v66, %v155
    %v170 = vadd.f32 %v66, %v160
    %v171 = vadd.f32 %v66, %v165
    %vm174 = vcmask 1046528
    %v175 = vrot.slane %v58, 1
    %v176 = vrot.slane %v50, 1
    %v177 = vsel %vm174, %v175, %v176
    %v178 = vrot.slane %v60, 1
    %v179 = vsel %vm174, %v176, %v178
    %v180 = vrot.slane %v59, 1
    %v181 = vrot.slane %v53, 1
    %v182 = vsel %vm174, %v180, %v181
    %v183 = vrot.slane %v61, 1
    %v184 = vsel %vm174, %v181, %v183
    %s185 = scalar_lea.vmem %s1, 4
    %v186 = vld [vmem:[%s185] sm:$0xf]
    %v187 = vsel %vm68, %v177, 0
    %v189 = vsel %vm68, %v179, 0
    %v191 = vsel %vm68, %v182, 0
    %v193 = vsel %vm68, %v184, 0
    %v196 = vsel %vm79, %v186, 0
    %198 = vmatprep.subr.mxu0 0.0
    %199 = vmatpush1.msra.mxu0 %v196
    %200 = vmatprep.subr.mxu0 0.0
    %201 = vmatpush1.msra.mxu0 0.0
    %202 = vmatprep.subr.mxu0 0.0
    %203 = vmatpush1.msra.mxu0 0.0
    %204 = vmatprep.subr.mxu0 0.0
    %205 = vmatpush1.msra.mxu0 0.0
    %206 = vmatprep.subr.mxu0 0.0
    %207 = vmatpush1.msra.mxu0 0.0
    %208 = vmatprep.subr.mxu0 0.0
    %209 = vmatpush1.msra.mxu0 0.0
    %210 = vmatprep.subr.mxu0 0.0
    %211 = vmatpush1.msra.mxu0 0.0
    %212 = vmatprep.subr.mxu0 0.0
    %213 = vmatpush1.msra.mxu0 0.0
    %214 = vmatprep.subr.mxu0 0.0
    %215 = vmatpush1.msra.mxu0 0.0
    %216 = vmatprep.subr.mxu0 0.0
    %217 = vmatpush1.msra.mxu0 0.0
    %218 = vmatprep.subr.mxu0 0.0
    %219 = vmatpush1.msra.mxu0 0.0
    %220 = vmatprep.subr.mxu0 0.0
    %221 = vmatpush1.msra.mxu0 0.0
    %222 = vmatprep.subr.mxu0 0.0
    %223 = vmatpush1.msra.mxu0 0.0
    %224 = vmatprep.subr.mxu0 0.0
    %225 = vmatpush1.msra.mxu0 0.0
    %226 = vmatprep.subr.mxu0 0.0
    %227 = vmatpush1.msra.mxu0 0.0
    %228 = vmatprep.subr.mxu0 0.0
    %229 = vmatpush1.msra.mxu0 0.0
    %230 = vmatprep.subr.mxu0 0.0
    %231 = vmatpush1.msra.mxu0 0.0
    %232 = vmatprep.subr.mxu0 0.0
    %233 = vmatpush1.msra.mxu0 0.0
    %234 = vmatprep.subr.mxu0 0.0
    %235 = vmatpush1.msra.mxu0 0.0
    %236 = vmatprep.subr.mxu0 0.0
    %237 = vmatpush1.msra.mxu0 0.0
    %238 = vmatprep.subr.mxu0 0.0
    %239 = vmatpush1.msra.mxu0 0.0
    %240 = vmatprep.subr.mxu0 0.0
    %241 = vmatpush1.msra.mxu0 0.0
    %242 = vmatprep.subr.mxu0 0.0
    %243 = vmatpush1.msra.mxu0 0.0
    %244 = vmatprep.subr.mxu0 0.0
    %245 = vmatpush1.msra.mxu0 0.0
    %246 = vmatprep.subr.mxu0 0.0
    %247 = vmatpush1.msra.mxu0 0.0
    %248 = vmatprep.subr.mxu0 0.0
    %249 = vmatpush1.msra.mxu0 0.0
    %250 = vmatprep.subr.mxu0 0.0
    %251 = vmatpush1.msra.mxu0 0.0
    %252 = vmatprep.subr.mxu0 0.0
    %253 = vmatpush1.msra.mxu0 0.0
    %254 = vmatprep.subr.mxu0 0.0
    %255 = vmatpush1.msra.mxu0 0.0
    %256 = vmatprep.subr.mxu0 0.0
    %257 = vmatpush1.msra.mxu0 0.0
    %258 = vmatprep.subr.mxu0 0.0
    %259 = vmatpush1.msra.mxu0 0.0
    %260 = vmatprep.subr.mxu0 0.0
    %261 = vmatpush1.msra.mxu0 0.0
    %262 = vmatprep.mubr.f32.mxu0 0.0
    %263 = vmatmul.mubr.f32.gmra.mrb[0].mxu0 %v187
    %v264 = vpop.f32.mrb[0].mxu0
    %v265 = vadd.f32 0.0, %v264
    %v266 = vpop.f32.mrb[0].mxu0
    %267 = vmatprep.mubr.f32.mxu0 0.0
    %268 = vmatmul.mubr.f32.gmra.mrb[0].mxu0 %v189
    %v269 = vpop.f32.mrb[0].mxu0
    %v270 = vadd.f32 0.0, %v269
    %v271 = vpop.f32.mrb[0].mxu0
    %272 = vmatprep.mubr.f32.mxu0 0.0
    %273 = vmatmul.mubr.f32.gmra.mrb[0].mxu0 %v191
    %v274 = vpop.f32.mrb[0].mxu0
    %v275 = vadd.f32 0.0, %v274
    %v276 = vpop.f32.mrb[0].mxu0
    %277 = vmatprep.mubr.f32.mxu0 0.0
    %278 = vmatmul.mubr.f32.gmra.mrb[0].mxu0 %v193
    %v279 = vpop.f32.mrb[0].mxu0
    %v280 = vadd.f32 0.0, %v279
    %v281 = vpop.f32.mrb[0].mxu0
    %282 = vdwg.mxu0
    %v283 = vadd.f32 %v168, %v265
    %v284 = vadd.f32 %v169, %v270
    %v285 = vadd.f32 %v170, %v275
    %v286 = vadd.f32 %v171, %v280
    %vm287 = vcmask 1045504
    %v288 = vrot.slane %v58, 2
    %v289 = vrot.slane %v50, 2
    %v290 = vsel %vm287, %v288, %v289
    %v291 = vrot.slane %v60, 2
    %v292 = vsel %vm287, %v289, %v291
    %v293 = vrot.slane %v59, 2
    %v294 = vrot.slane %v53, 2
    %v295 = vsel %vm287, %v293, %v294
    %v296 = vrot.slane %v61, 2
    %v297 = vsel %vm287, %v294, %v296
    %s298 = scalar_lea.vmem %s1, 8
    %v299 = vld [vmem:[%s298] sm:$0xf]
    %v300 = vsel %vm68, %v290, 0
    %v302 = vsel %vm68, %v292, 0
    %v304 = vsel %vm68, %v295, 0
    %v306 = vsel %vm68, %v297, 0
    %v309 = vsel %vm79, %v299, 0
    %311 = vmatprep.subr.mxu0 0.0
    %312 = vmatpush1.msra.mxu0 %v309
    %313 = vmatprep.subr.mxu0 0.0
    %314 = vmatpush1.msra.mxu0 0.0
    %315 = vmatprep.subr.mxu0 0.0
    %316 = vmatpush1.msra.mxu0 0.0
    %317 = vmatprep.subr.mxu0 0.0
    %318 = vmatpush1.msra.mxu0 0.0
    %319 = vmatprep.subr.mxu0 0.0
    %320 = vmatpush1.msra.mxu0 0.0
    %321 = vmatprep.subr.mxu0 0.0
    %322 = vmatpush1.msra.mxu0 0.0
    %323 = vmatprep.subr.mxu0 0.0
    %324 = vmatpush1.msra.mxu0 0.0
    %325 = vmatprep.subr.mxu0 0.0
    %326 = vmatpush1.msra.mxu0 0.0
    %327 = vmatprep.subr.mxu0 0.0
    %328 = vmatpush1.msra.mxu0 0.0
    %329 = vmatprep.subr.mxu0 0.0
    %330 = vmatpush1.msra.mxu0 0.0
    %331 = vmatprep.subr.mxu0 0.0
    %332 = vmatpush1.msra.mxu0 0.0
    %333 = vmatprep.subr.mxu0 0.0
    %334 = vmatpush1.msra.mxu0 0.0
    %335 = vmatprep.subr.mxu0 0.0
    %336 = vmatpush1.msra.mxu0 0.0
    %337 = vmatprep.subr.mxu0 0.0
    %338 = vmatpush1.msra.mxu0 0.0
    %339 = vmatprep.subr.mxu0 0.0
    %340 = vmatpush1.msra.mxu0 0.0
    %341 = vmatprep.subr.mxu0 0.0
    %342 = vmatpush1.msra.mxu0 0.0
    %343 = vmatprep.subr.mxu0 0.0
    %344 = vmatpush1.msra.mxu0 0.0
    %345 = vmatprep.subr.mxu0 0.0
    %346 = vmatpush1.msra.mxu0 0.0
    %347 = vmatprep.subr.mxu0 0.0
    %348 = vmatpush1.msra.mxu0 0.0
    %349 = vmatprep.subr.mxu0 0.0
    %350 = vmatpush1.msra.mxu0 0.0
    %351 = vmatprep.subr.mxu0 0.0
    %352 = vmatpush1.msra.mxu0 0.0
    %353 = vmatprep.subr.mxu0 0.0
    %354 = vmatpush1.msra.mxu0 0.0
    %355 = vmatprep.subr.mxu0 0.0
    %356 = vmatpush1.msra.mxu0 0.0
    %357 = vmatprep.subr.mxu0 0.0
    %358 = vmatpush1.msra.mxu0 0.0
    %359 = vmatprep.subr.mxu0 0.0
    %360 = vmatpush1.msra.mxu0 0.0
    %361 = vmatprep.subr.mxu0 0.0
    %362 = vmatpush1.msra.mxu0 0.0
    %363 = vmatprep.subr.mxu0 0.0
    %364 = vmatpush1.msra.mxu0 0.0
    %365 = vmatprep.subr.mxu0 0.0
    %366 = vmatpush1.msra.mxu0 0.0
    %367 = vmatprep.subr.mxu0 0.0
    %368 = vmatpush1.msra.mxu0 0.0
    %369 = vmatprep.subr.mxu0 0.0
    %370 = vmatpush1.msra.mxu0 0.0
    %371 = vmatprep.subr.mxu0 0.0
    %372 = vmatpush1.msra.mxu0 0.0
    %373 = vmatprep.subr.mxu0 0.0
    %374 = vmatpush1.msra.mxu0 0.0
    %375 = vmatprep.mubr.f32.mxu0 0.0
    %376 = vmatmul.mubr.f32.gmra.mrb[0].mxu0 %v300
    %v377 = vpop.f32.mrb[0].mxu0
    %v378 = vadd.f32 0.0, %v377
    %v379 = vpop.f32.mrb[0].mxu0
    %380 = vmatprep.mubr.f32.mxu0 0.0
    %381 = vmatmul.mubr.f32.gmra.mrb[0].mxu0 %v302
    %v382 = vpop.f32.mrb[0].mxu0
    %v383 = vadd.f32 0.0, %v382
    %v384 = vpop.f32.mrb[0].mxu0
    %385 = vmatprep.mubr.f32.mxu0 0.0
    %386 = vmatmul.mubr.f32.gmra.mrb[0].mxu0 %v304
    %v387 = vpop.f32.mrb[0].mxu0
    %v388 = vadd.f32 0.0, %v387
    %v389 = vpop.f32.mrb[0].mxu0
    %390 = vmatprep.mubr.f32.mxu0 0.0
    %391 = vmatmul.mubr.f32.gmra.mrb[0].mxu0 %v306
    %v392 = vpop.f32.mrb[0].mxu0
    %v393 = vadd.f32 0.0, %v392
    %v394 = vpop.f32.mrb[0].mxu0
    %395 = vdwg.mxu0
    %v396 = vadd.f32 %v283, %v378
    %v397 = vadd.f32 %v284, %v383
    %v398 = vadd.f32 %v285, %v388
    %v399 = vadd.f32 %v286, %v393
    %v400 = vmul.f32 %v396, 0.5
    %v401 = vmul.f32 %v397, 0.5
    %v402 = vmul.f32 %v398, 0.5
    %v403 = vmul.f32 %v399, 0.5
    %v404 = vmul.f32 %v396, 0.70710677
    %v405 = vmul.f32 %v397, 0.70710677
    %v406 = vmul.f32 %v398, 0.70710677
    %v407 = vmul.f32 %v399, 0.70710677
    %v408 = verf.f32.pop %v404
    %v409 = verf.f32.pop %v405
    %v410 = verf.f32.pop %v406
    %v411 = verf.f32.pop %v407
    %v412 = vadd.f32 %v408, 1.0
    %v413 = vadd.f32 %v409, 1.0
    %v414 = vadd.f32 %v410, 1.0
    %v415 = vadd.f32 %v411, 1.0
    %v416 = vmul.f32 %v400, %v412
    %v417 = vmul.f32 %v401, %v413
    %v418 = vmul.f32 %v402, %v414
    %v419 = vmul.f32 %v403, %v415
    %v420 = vld [vmem:[%s4 + $0x1] sm:$0x1]
    %vm425 = vcmask 1041408
    %v426 = vrot.slane %v416, 6
    %v427 = vrot.slane %v417, 6
    %v428 = vsel %vm425, %v426, %v427
    %v429 = vrot.slane %v418, 6
    %v430 = vrot.slane %v419, 6
    %v431 = vsel %vm425, %v429, %v430
    %v436 = vsel %vm425, 0.0, %v426
    %v437 = vsel %vm425, 0.0, %v429
    %v438 = vsel %vm425, %v427, 0.0
    %v439 = vsel %vm425, %v430, 0.0
    %v440 = vlaneseq
    %v441 = vshrl.u32 %v440, 7
    %v442 = vsub.s32 0, %v441
    %v443 = vrot.slane %v420, %v442
    %v444 = vadd.f32 %v443, 0.0
    %v445 = vld [vmem:[#allocation2] sm:$0xff]
    %v446 = vld [vmem:[#allocation2 + $0x8] sm:$0xff]
    %v447 = vld [vmem:[#allocation2 + $0x10] sm:$0xff]
    %v448 = vld [vmem:[#allocation2 + $0x18] sm:$0xff]
    %vm449 = vcmask 261120
    %v451 = vsel %vm449, %v436, 0
    %v453 = vsel %vm449, %v428, 0
    %v456 = vsel %vm449, %v437, 0
    %v458 = vsel %vm449, %v431, 0
    %460 = vmatprep.subr.mxu0 0.0
    %461 = vmatpush1.msra.mxu0 %v445
    %462 = vmatprep.subr.mxu0 0.0
    %463 = vmatpush1.msra.mxu0 %v446
    %464 = vmatprep.subr.mxu0 0.0
    %465 = vmatpush1.msra.mxu0 %v447
    %466 = vmatprep.subr.mxu0 0.0
    %467 = vmatpush1.msra.mxu0 %v448
    %468 = vmatprep.subr.mxu0 0.0
    %469 = vmatpush1.msra.mxu0 0.0
    %470 = vmatprep.subr.mxu0 0.0
    %471 = vmatpush1.msra.mxu0 0.0
    %472 = vmatprep.subr.mxu0 0.0
    %473 = vmatpush1.msra.mxu0 0.0
    %474 = vmatprep.subr.mxu0 0.0
    %475 = vmatpush1.msra.mxu0 0.0
    %476 = vmatprep.subr.mxu0 0.0
    %477 = vmatpush1.msra.mxu0 0.0
    %478 = vmatprep.subr.mxu0 0.0
    %479 = vmatpush1.msra.mxu0 0.0
    %480 = vmatprep.subr.mxu0 0.0
    %481 = vmatpush1.msra.mxu0 0.0
    %482 = vmatprep.subr.mxu0 0.0
    %483 = vmatpush1.msra.mxu0 0.0
    %484 = vmatprep.subr.mxu0 0.0
    %485 = vmatpush1.msra.mxu0 0.0
    %486 = vmatprep.subr.mxu0 0.0
    %487 = vmatpush1.msra.mxu0 0.0
    %488 = vmatprep.subr.mxu0 0.0
    %489 = vmatpush1.msra.mxu0 0.0
    %490 = vmatprep.subr.mxu0 0.0
    %491 = vmatpush1.msra.mxu0 0.0
    %492 = vmatprep.subr.mxu0 0.0
    %493 = vmatpush1.msra.mxu0 0.0
    %494 = vmatprep.subr.mxu0 0.0
    %495 = vmatpush1.msra.mxu0 0.0
    %496 = vmatprep.subr.mxu0 0.0
    %497 = vmatpush1.msra.mxu0 0.0
    %498 = vmatprep.subr.mxu0 0.0
    %499 = vmatpush1.msra.mxu0 0.0
    %500 = vmatprep.subr.mxu0 0.0
    %501 = vmatpush1.msra.mxu0 0.0
    %502 = vmatprep.subr.mxu0 0.0
    %503 = vmatpush1.msra.mxu0 0.0
    %504 = vmatprep.subr.mxu0 0.0
    %505 = vmatpush1.msra.mxu0 0.0
    %506 = vmatprep.subr.mxu0 0.0
    %507 = vmatpush1.msra.mxu0 0.0
    %508 = vmatprep.subr.mxu0 0.0
    %509 = vmatpush1.msra.mxu0 0.0
    %510 = vmatprep.subr.mxu0 0.0
    %511 = vmatpush1.msra.mxu0 0.0
    %512 = vmatprep.subr.mxu0 0.0
    %513 = vmatpush1.msra.mxu0 0.0
    %514 = vmatprep.subr.mxu0 0.0
    %515 = vmatpush1.msra.mxu0 0.0
    %516 = vmatprep.subr.mxu0 0.0
    %517 = vmatpush1.msra.mxu0 0.0
    %518 = vmatprep.subr.mxu0 0.0
    %519 = vmatpush1.msra.mxu0 0.0
    %520 = vmatprep.subr.mxu0 0.0
    %521 = vmatpush1.msra.mxu0 0.0
    %522 = vmatprep.subr.mxu0 0.0
    %523 = vmatpush1.msra.mxu0 0.0
    %524 = vmatprep.mubr.f32.mxu0 0.0
    %525 = vmatmul.mubr.f32.gmra.mrb[0].mxu0 %v451
    %v526 = vpop.f32.mrb[0].mxu0
    %v527 = vadd.f32 0.0, %v526
    %v528 = vpop.f32.mrb[0].mxu0
    %529 = vmatprep.mubr.f32.mxu0 0.0
    %530 = vmatmul.mubr.f32.gmra.mrb[0].mxu0 %v453
    %v531 = vpop.f32.mrb[0].mxu0
    %v532 = vadd.f32 0.0, %v531
    %v533 = vpop.f32.mrb[0].mxu0
    %534 = vmatprep.mubr.f32.mxu0 0.0
    %535 = vmatmul.mubr.f32.gmra.mrb[0].mxu0 %v456
    %v536 = vpop.f32.mrb[0].mxu0
    %v537 = vadd.f32 0.0, %v536
    %v538 = vpop.f32.mrb[0].mxu0
    %539 = vmatprep.mubr.f32.mxu0 0.0
    %540 = vmatmul.mubr.f32.gmra.mrb[0].mxu0 %v458
    %v541 = vpop.f32.mrb[0].mxu0
    %v542 = vadd.f32 0.0, %v541
    %v543 = vpop.f32.mrb[0].mxu0
    %544 = vdwg.mxu0
    %v545 = vadd.f32 %v444, %v527
    %v546 = vadd.f32 %v444, %v532
    %v547 = vadd.f32 %v444, %v537
    %v548 = vadd.f32 %v444, %v542
    %v551 = vrot.slane %v436, 1
    %v552 = vrot.slane %v428, 1
    %v553 = vsel %vm174, %v551, %v552
    %v554 = vrot.slane %v438, 1
    %v555 = vsel %vm174, %v552, %v554
    %v556 = vrot.slane %v437, 1
    %v557 = vrot.slane %v431, 1
    %v558 = vsel %vm174, %v556, %v557
    %v559 = vrot.slane %v439, 1
    %v560 = vsel %vm174, %v557, %v559
    %s561 = scalar_lea.vmem [#allocation2], 32
    %v562 = vld [vmem:[%s561] sm:$0xff]
    %v563 = vld [vmem:[%s561 + $0x8] sm:$0xff]
    %v564 = vld [vmem:[%s561 + $0x10] sm:$0xff]
    %v565 = vld [vmem:[%s561 + $0x18] sm:$0xff]
    %v566 = vsel %vm449, %v553, 0
    %v568 = vsel %vm449, %v555, 0
    %v570 = vsel %vm449, %v558, 0
    %v572 = vsel %vm449, %v560, 0
    %574 = vmatprep.subr.mxu0 0.0
    %575 = vmatpush1.msra.mxu0 %v562
    %576 = vmatprep.subr.mxu0 0.0
    %577 = vmatpush1.msra.mxu0 %v563
    %578 = vmatprep.subr.mxu0 0.0
    %579 = vmatpush1.msra.mxu0 %v564
    %580 = vmatprep.subr.mxu0 0.0
    %581 = vmatpush1.msra.mxu0 %v565
    %582 = vmatprep.subr.mxu0 0.0
    %583 = vmatpush1.msra.mxu0 0.0
    %584 = vmatprep.subr.mxu0 0.0
    %585 = vmatpush1.msra.mxu0 0.0
    %586 = vmatprep.subr.mxu0 0.0
    %587 = vmatpush1.msra.mxu0 0.0
    %588 = vmatprep.subr.mxu0 0.0
    %589 = vmatpush1.msra.mxu0 0.0
    %590 = vmatprep.subr.mxu0 0.0
    %591 = vmatpush1.msra.mxu0 0.0
    %592 = vmatprep.subr.mxu0 0.0
    %593 = vmatpush1.msra.mxu0 0.0
    %594 = vmatprep.subr.mxu0 0.0
    %595 = vmatpush1.msra.mxu0 0.0
    %596 = vmatprep.subr.mxu0 0.0
    %597 = vmatpush1.msra.mxu0 0.0
    %598 = vmatprep.subr.mxu0 0.0
    %599 = vmatpush1.msra.mxu0 0.0
    %600 = vmatprep.subr.mxu0 0.0
    %601 = vmatpush1.msra.mxu0 0.0
    %602 = vmatprep.subr.mxu0 0.0
    %603 = vmatpush1.msra.mxu0 0.0
    %604 = vmatprep.subr.mxu0 0.0
    %605 = vmatpush1.msra.mxu0 0.0
    %606 = vmatprep.subr.mxu0 0.0
    %607 = vmatpush1.msra.mxu0 0.0
    %608 = vmatprep.subr.mxu0 0.0
    %609 = vmatpush1.msra.mxu0 0.0
    %610 = vmatprep.subr.mxu0 0.0
    %611 = vmatpush1.msra.mxu0 0.0
    %612 = vmatprep.subr.mxu0 0.0
    %613 = vmatpush1.msra.mxu0 0.0
    %614 = vmatprep.subr.mxu0 0.0
    %615 = vmatpush1.msra.mxu0 0.0
    %616 = vmatprep.subr.mxu0 0.0
    %617 = vmatpush1.msra.mxu0 0.0
    %618 = vmatprep.subr.mxu0 0.0
    %619 = vmatpush1.msra.mxu0 0.0
    %620 = vmatprep.subr.mxu0 0.0
    %621 = vmatpush1.msra.mxu0 0.0
    %622 = vmatprep.subr.mxu0 0.0
    %623 = vmatpush1.msra.mxu0 0.0
    %624 = vmatprep.subr.mxu0 0.0
    %625 = vmatpush1.msra.mxu0 0.0
    %626 = vmatprep.subr.mxu0 0.0
    %627 = vmatpush1.msra.mxu0 0.0
    %628 = vmatprep.subr.mxu0 0.0
    %629 = vmatpush1.msra.mxu0 0.0
    %630 = vmatprep.subr.mxu0 0.0
    %631 = vmatpush1.msra.mxu0 0.0
    %632 = vmatprep.subr.mxu0 0.0
    %633 = vmatpush1.msra.mxu0 0.0
    %634 = vmatprep.subr.mxu0 0.0
    %635 = vmatpush1.msra.mxu0 0.0
    %636 = vmatprep.subr.mxu0 0.0
    %637 = vmatpush1.msra.mxu0 0.0
    %638 = vmatprep.mubr.f32.mxu0 0.0
    %639 = vmatmul.mubr.f32.gmra.mrb[0].mxu0 %v566
    %v640 = vpop.f32.mrb[0].mxu0
    %v641 = vadd.f32 0.0, %v640
    %v642 = vpop.f32.mrb[0].mxu0
    %643 = vmatprep.mubr.f32.mxu0 0.0
    %644 = vmatmul.mubr.f32.gmra.mrb[0].mxu0 %v568
    %v645 = vpop.f32.mrb[0].mxu0
    %v646 = vadd.f32 0.0, %v645
    %v647 = vpop.f32.mrb[0].mxu0
    %648 = vmatprep.mubr.f32.mxu0 0.0
    %649 = vmatmul.mubr.f32.gmra.mrb[0].mxu0 %v570
    %v650 = vpop.f32.mrb[0].mxu0
    %v651 = vadd.f32 0.0, %v650
    %v652 = vpop.f32.mrb[0].mxu0
    %653 = vmatprep.mubr.f32.mxu0 0.0
    %654 = vmatmul.mubr.f32.gmra.mrb[0].mxu0 %v572
    %v655 = vpop.f32.mrb[0].mxu0
    %v656 = vadd.f32 0.0, %v655
    %v657 = vpop.f32.mrb[0].mxu0
    %658 = vdwg.mxu0
    %v659 = vadd.f32 %v545, %v641
    %v660 = vadd.f32 %v546, %v646
    %v661 = vadd.f32 %v547, %v651
    %v662 = vadd.f32 %v548, %v656
    %v663 = vrot.slane %v436, 2
    %v664 = vrot.slane %v428, 2
    %v665 = vsel %vm287, %v663, %v664
    %v666 = vrot.slane %v438, 2
    %v667 = vsel %vm287, %v664, %v666
    %v668 = vrot.slane %v437, 2
    %v669 = vrot.slane %v431, 2
    %v670 = vsel %vm287, %v668, %v669
    %v671 = vrot.slane %v439, 2
    %v672 = vsel %vm287, %v669, %v671
    %s673 = scalar_lea.vmem [#allocation2], 64
    %v674 = vld [vmem:[%s673] sm:$0xff]
    %v675 = vld [vmem:[%s673 + $0x8] sm:$0xff]
    %v676 = vld [vmem:[%s673 + $0x10] sm:$0xff]
    %v677 = vld [vmem:[%s673 + $0x18] sm:$0xff]
    %v678 = vsel %vm449, %v665, 0
    %v680 = vsel %vm449, %v667, 0
    %v682 = vsel %vm449, %v670, 0
    %v684 = vsel %vm449, %v672, 0
    %686 = vmatprep.subr.mxu0 0.0
    %687 = vmatpush1.msra.mxu0 %v674
    %688 = vmatprep.subr.mxu0 0.0
    %689 = vmatpush1.msra.mxu0 %v675
    %690 = vmatprep.subr.mxu0 0.0
    %691 = vmatpush1.msra.mxu0 %v676
    %692 = vmatprep.subr.mxu0 0.0
    %693 = vmatpush1.msra.mxu0 %v677
    %694 = vmatprep.subr.mxu0 0.0
    %695 = vmatpush1.msra.mxu0 0.0
    %696 = vmatprep.subr.mxu0 0.0
    %697 = vmatpush1.msra.mxu0 0.0
    %698 = vmatprep.subr.mxu0 0.0
    %699 = vmatpush1.msra.mxu0 0.0
    %700 = vmatprep.subr.mxu0 0.0
    %701 = vmatpush1.msra.mxu0 0.0
    %702 = vmatprep.subr.mxu0 0.0
    %703 = vmatpush1.msra.mxu0 0.0
    %704 = vmatprep.subr.mxu0 0.0
    %705 = vmatpush1.msra.mxu0 0.0
    %706 = vmatprep.subr.mxu0 0.0
    %707 = vmatpush1.msra.mxu0 0.0
    %708 = vmatprep.subr.mxu0 0.0
    %709 = vmatpush1.msra.mxu0 0.0
    %710 = vmatprep.subr.mxu0 0.0
    %711 = vmatpush1.msra.mxu0 0.0
    %712 = vmatprep.subr.mxu0 0.0
    %713 = vmatpush1.msra.mxu0 0.0
    %714 = vmatprep.subr.mxu0 0.0
    %715 = vmatpush1.msra.mxu0 0.0
    %716 = vmatprep.subr.mxu0 0.0
    %717 = vmatpush1.msra.mxu0 0.0
    %718 = vmatprep.subr.mxu0 0.0
    %719 = vmatpush1.msra.mxu0 0.0
    %720 = vmatprep.subr.mxu0 0.0
    %721 = vmatpush1.msra.mxu0 0.0
    %722 = vmatprep.subr.mxu0 0.0
    %723 = vmatpush1.msra.mxu0 0.0
    %724 = vmatprep.subr.mxu0 0.0
    %725 = vmatpush1.msra.mxu0 0.0
    %726 = vmatprep.subr.mxu0 0.0
    %727 = vmatpush1.msra.mxu0 0.0
    %728 = vmatprep.subr.mxu0 0.0
    %729 = vmatpush1.msra.mxu0 0.0
    %730 = vmatprep.subr.mxu0 0.0
    %731 = vmatpush1.msra.mxu0 0.0
    %732 = vmatprep.subr.mxu0 0.0
    %733 = vmatpush1.msra.mxu0 0.0
    %734 = vmatprep.subr.mxu0 0.0
    %735 = vmatpush1.msra.mxu0 0.0
    %736 = vmatprep.subr.mxu0 0.0
    %737 = vmatpush1.msra.mxu0 0.0
    %738 = vmatprep.subr.mxu0 0.0
    %739 = vmatpush1.msra.mxu0 0.0
    %740 = vmatprep.subr.mxu0 0.0
    %741 = vmatpush1.msra.mxu0 0.0
    %742 = vmatprep.subr.mxu0 0.0
    %743 = vmatpush1.msra.mxu0 0.0
    %744 = vmatprep.subr.mxu0 0.0
    %745 = vmatpush1.msra.mxu0 0.0
    %746 = vmatprep.subr.mxu0 0.0
    %747 = vmatpush1.msra.mxu0 0.0
    %748 = vmatprep.subr.mxu0 0.0
    %749 = vmatpush1.msra.mxu0 0.0
    %750 = vmatprep.mubr.f32.mxu0 0.0
    %751 = vmatmul.mubr.f32.gmra.mrb[0].mxu0 %v678
    %v752 = vpop.f32.mrb[0].mxu0
    %v753 = vadd.f32 0.0, %v752
    %v754 = vpop.f32.mrb[0].mxu0
    %755 = vmatprep.mubr.f32.mxu0 0.0
    %756 = vmatmul.mubr.f32.gmra.mrb[0].mxu0 %v680
    %v757 = vpop.f32.mrb[0].mxu0
    %v758 = vadd.f32 0.0, %v757
    %v759 = vpop.f32.mrb[0].mxu0
    %760 = vmatprep.mubr.f32.mxu0 0.0
    %761 = vmatmul.mubr.f32.gmra.mrb[0].mxu0 %v682
    %v762 = vpop.f32.mrb[0].mxu0
    %v763 = vadd.f32 0.0, %v762
    %v764 = vpop.f32.mrb[0].mxu0
    %765 = vmatprep.mubr.f32.mxu0 0.0
    %766 = vmatmul.mubr.f32.gmra.mrb[0].mxu0 %v684
    %v767 = vpop.f32.mrb[0].mxu0
    %v768 = vadd.f32 0.0, %v767
    %v769 = vpop.f32.mrb[0].mxu0
    %770 = vdwg.mxu0
    %v771 = vadd.f32 %v659, %v753
    %v772 = vadd.f32 %v660, %v758
    %v773 = vadd.f32 %v661, %v763
    %v774 = vadd.f32 %v662, %v768
    %vm775 = vcmask 1044480
    %v776 = vrot.slane %v436, 3
    %v777 = vrot.slane %v428, 3
    %v778 = vsel %vm775, %v776, %v777
    %v779 = vrot.slane %v438, 3
    %v780 = vsel %vm775, %v777, %v779
    %v781 = vrot.slane %v437, 3
    %v782 = vrot.slane %v431, 3
    %v783 = vsel %vm775, %v781, %v782
    %v784 = vrot.slane %v439, 3
    %v785 = vsel %vm775, %v782, %v784
    %s786 = scalar_lea.vmem [#allocation2], 96
    %v787 = vld [vmem:[%s786] sm:$0xff]
    %v788 = vld [vmem:[%s786 + $0x8] sm:$0xff]
    %v789 = vld [vmem:[%s786 + $0x10] sm:$0xff]
    %v790 = vld [vmem:[%s786 + $0x18] sm:$0xff]
    %v791 = vsel %vm449, %v778, 0
    %v793 = vsel %vm449, %v780, 0
    %v795 = vsel %vm449, %v783, 0
    %v797 = vsel %vm449, %v785, 0
    %799 = vmatprep.subr.mxu0 0.0
    %800 = vmatpush1.msra.mxu0 %v787
    %801 = vmatprep.subr.mxu0 0.0
    %802 = vmatpush1.msra.mxu0 %v788
    %803 = vmatprep.subr.mxu0 0.0
    %804 = vmatpush1.msra.mxu0 %v789
    %805 = vmatprep.subr.mxu0 0.0
    %806 = vmatpush1.msra.mxu0 %v790
    %807 = vmatprep.subr.mxu0 0.0
    %808 = vmatpush1.msra.mxu0 0.0
    %809 = vmatprep.subr.mxu0 0.0
    %810 = vmatpush1.msra.mxu0 0.0
    %811 = vmatprep.subr.mxu0 0.0
    %812 = vmatpush1.msra.mxu0 0.0
    %813 = vmatprep.subr.mxu0 0.0
    %814 = vmatpush1.msra.mxu0 0.0
    %815 = vmatprep.subr.mxu0 0.0
    %816 = vmatpush1.msra.mxu0 0.0
    %817 = vmatprep.subr.mxu0 0.0
    %818 = vmatpush1.msra.mxu0 0.0
    %819 = vmatprep.subr.mxu0 0.0
    %820 = vmatpush1.msra.mxu0 0.0
    %821 = vmatprep.subr.mxu0 0.0
    %822 = vmatpush1.msra.mxu0 0.0
    %823 = vmatprep.subr.mxu0 0.0
    %824 = vmatpush1.msra.mxu0 0.0
    %825 = vmatprep.subr.mxu0 0.0
    %826 = vmatpush1.msra.mxu0 0.0
    %827 = vmatprep.subr.mxu0 0.0
    %828 = vmatpush1.msra.mxu0 0.0
    %829 = vmatprep.subr.mxu0 0.0
    %830 = vmatpush1.msra.mxu0 0.0
    %831 = vmatprep.subr.mxu0 0.0
    %832 = vmatpush1.msra.mxu0 0.0
    %833 = vmatprep.subr.mxu0 0.0
    %834 = vmatpush1.msra.mxu0 0.0
    %835 = vmatprep.subr.mxu0 0.0
    %836 = vmatpush1.msra.mxu0 0.0
    %837 = vmatprep.subr.mxu0 0.0
    %838 = vmatpush1.msra.mxu0 0.0
    %839 = vmatprep.subr.mxu0 0.0
    %840 = vmatpush1.msra.mxu0 0.0
    %841 = vmatprep.subr.mxu0 0.0
    %842 = vmatpush1.msra.mxu0 0.0
    %843 = vmatprep.subr.mxu0 0.0
    %844 = vmatpush1.msra.mxu0 0.0
    %845 = vmatprep.subr.mxu0 0.0
    %846 = vmatpush1.msra.mxu0 0.0
    %847 = vmatprep.subr.mxu0 0.0
    %848 = vmatpush1.msra.mxu0 0.0
    %849 = vmatprep.subr.mxu0 0.0
    %850 = vmatpush1.msra.mxu0 0.0
    %851 = vmatprep.subr.mxu0 0.0
    %852 = vmatpush1.msra.mxu0 0.0
    %853 = vmatprep.subr.mxu0 0.0
    %854 = vmatpush1.msra.mxu0 0.0
    %855 = vmatprep.subr.mxu0 0.0
    %856 = vmatpush1.msra.mxu0 0.0
    %857 = vmatprep.subr.mxu0 0.0
    %858 = vmatpush1.msra.mxu0 0.0
    %859 = vmatprep.subr.mxu0 0.0
    %860 = vmatpush1.msra.mxu0 0.0
    %861 = vmatprep.subr.mxu0 0.0
    %862 = vmatpush1.msra.mxu0 0.0
    %863 = vmatprep.mubr.f32.mxu0 0.0
    %864 = vmatmul.mubr.f32.gmra.mrb[0].mxu0 %v791
    %v865 = vpop.f32.mrb[0].mxu0
    %v866 = vadd.f32 0.0, %v865
    %v867 = vpop.f32.mrb[0].mxu0
    %868 = vmatprep.mubr.f32.mxu0 0.0
    %869 = vmatmul.mubr.f32.gmra.mrb[0].mxu0 %v793
    %v870 = vpop.f32.mrb[0].mxu0
    %v871 = vadd.f32 0.0, %v870
    %v872 = vpop.f32.mrb[0].mxu0
    %873 = vmatprep.mubr.f32.mxu0 0.0
    %874 = vmatmul.mubr.f32.gmra.mrb[0].mxu0 %v795
    %v875 = vpop.f32.mrb[0].mxu0
    %v876 = vadd.f32 0.0, %v875
    %v877 = vpop.f32.mrb[0].mxu0
    %878 = vmatprep.mubr.f32.mxu0 0.0
    %879 = vmatmul.mubr.f32.gmra.mrb[0].mxu0 %v797
    %v880 = vpop.f32.mrb[0].mxu0
    %v881 = vadd.f32 0.0, %v880
    %v882 = vpop.f32.mrb[0].mxu0
    %883 = vdwg.mxu0
    %v884 = vadd.f32 %v771, %v866
    %v885 = vadd.f32 %v772, %v871
    %v886 = vadd.f32 %v773, %v876
    %v887 = vadd.f32 %v774, %v881
    %v888 = vrot.slane %v436, 4
    %v889 = vrot.slane %v428, 4
    %v890 = vsel %vm79, %v888, %v889
    %v891 = vrot.slane %v438, 4
    %v892 = vsel %vm79, %v889, %v891
    %v893 = vrot.slane %v437, 4
    %v894 = vrot.slane %v431, 4
    %v895 = vsel %vm79, %v893, %v894
    %v896 = vrot.slane %v439, 4
    %v897 = vsel %vm79, %v894, %v896
    %s898 = scalar_lea.vmem [#allocation2], 128
    %v899 = vld [vmem:[%s898] sm:$0xff]
    %v900 = vld [vmem:[%s898 + $0x8] sm:$0xff]
    %v901 = vld [vmem:[%s898 + $0x10] sm:$0xff]
    %v902 = vld [vmem:[%s898 + $0x18] sm:$0xff]
    %v903 = vsel %vm449, %v890, 0
    %v905 = vsel %vm449, %v892, 0
    %v907 = vsel %vm449, %v895, 0
    %v909 = vsel %vm449, %v897, 0
    %911 = vmatprep.subr.mxu0 0.0
    %912 = vmatpush1.msra.mxu0 %v899
    %913 = vmatprep.subr.mxu0 0.0
    %914 = vmatpush1.msra.mxu0 %v900
    %915 = vmatprep.subr.mxu0 0.0
    %916 = vmatpush1.msra.mxu0 %v901
    %917 = vmatprep.subr.mxu0 0.0
    %918 = vmatpush1.msra.mxu0 %v902
    %919 = vmatprep.subr.mxu0 0.0
    %920 = vmatpush1.msra.mxu0 0.0
    %921 = vmatprep.subr.mxu0 0.0
    %922 = vmatpush1.msra.mxu0 0.0
    %923 = vmatprep.subr.mxu0 0.0
    %924 = vmatpush1.msra.mxu0 0.0
    %925 = vmatprep.subr.mxu0 0.0
    %926 = vmatpush1.msra.mxu0 0.0
    %927 = vmatprep.subr.mxu0 0.0
    %928 = vmatpush1.msra.mxu0 0.0
    %929 = vmatprep.subr.mxu0 0.0
    %930 = vmatpush1.msra.mxu0 0.0
    %931 = vmatprep.subr.mxu0 0.0
    %932 = vmatpush1.msra.mxu0 0.0
    %933 = vmatprep.subr.mxu0 0.0
    %934 = vmatpush1.msra.mxu0 0.0
    %935 = vmatprep.subr.mxu0 0.0
    %936 = vmatpush1.msra.mxu0 0.0
    %937 = vmatprep.subr.mxu0 0.0
    %938 = vmatpush1.msra.mxu0 0.0
    %939 = vmatprep.subr.mxu0 0.0
    %940 = vmatpush1.msra.mxu0 0.0
    %941 = vmatprep.subr.mxu0 0.0
    %942 = vmatpush1.msra.mxu0 0.0
    %943 = vmatprep.subr.mxu0 0.0
    %944 = vmatpush1.msra.mxu0 0.0
    %945 = vmatprep.subr.mxu0 0.0
    %946 = vmatpush1.msra.mxu0 0.0
    %947 = vmatprep.subr.mxu0 0.0
    %948 = vmatpush1.msra.mxu0 0.0
    %949 = vmatprep.subr.mxu0 0.0
    %950 = vmatpush1.msra.mxu0 0.0
    %951 = vmatprep.subr.mxu0 0.0
    %952 = vmatpush1.msra.mxu0 0.0
    %953 = vmatprep.subr.mxu0 0.0
    %954 = vmatpush1.msra.mxu0 0.0
    %955 = vmatprep.subr.mxu0 0.0
    %956 = vmatpush1.msra.mxu0 0.0
    %957 = vmatprep.subr.mxu0 0.0
    %958 = vmatpush1.msra.mxu0 0.0
    %959 = vmatprep.subr.mxu0 0.0
    %960 = vmatpush1.msra.mxu0 0.0
    %961 = vmatprep.subr.mxu0 0.0
    %962 = vmatpush1.msra.mxu0 0.0
    %963 = vmatprep.subr.mxu0 0.0
    %964 = vmatpush1.msra.mxu0 0.0
    %965 = vmatprep.subr.mxu0 0.0
    %966 = vmatpush1.msra.mxu0 0.0
    %967 = vmatprep.subr.mxu0 0.0
    %968 = vmatpush1.msra.mxu0 0.0
    %969 = vmatprep.subr.mxu0 0.0
    %970 = vmatpush1.msra.mxu0 0.0
    %971 = vmatprep.subr.mxu0 0.0
    %972 = vmatpush1.msra.mxu0 0.0
    %973 = vmatprep.subr.mxu0 0.0
    %974 = vmatpush1.msra.mxu0 0.0
    %975 = vmatprep.mubr.f32.mxu0 0.0
    %976 = vmatmul.mubr.f32.gmra.mrb[0].mxu0 %v903
    %v977 = vpop.f32.mrb[0].mxu0
    %v978 = vadd.f32 0.0, %v977
    %v979 = vpop.f32.mrb[0].mxu0
    %980 = vmatprep.mubr.f32.mxu0 0.0
    %981 = vmatmul.mubr.f32.gmra.mrb[0].mxu0 %v905
    %v982 = vpop.f32.mrb[0].mxu0
    %v983 = vadd.f32 0.0, %v982
    %v984 = vpop.f32.mrb[0].mxu0
    %985 = vmatprep.mubr.f32.mxu0 0.0
    %986 = vmatmul.mubr.f32.gmra.mrb[0].mxu0 %v907
    %v987 = vpop.f32.mrb[0].mxu0
    %v988 = vadd.f32 0.0, %v987
    %v989 = vpop.f32.mrb[0].mxu0
    %990 = vmatprep.mubr.f32.mxu0 0.0
    %991 = vmatmul.mubr.f32.gmra.mrb[0].mxu0 %v909
    %v992 = vpop.f32.mrb[0].mxu0
    %v993 = vadd.f32 0.0, %v992
    %v994 = vpop.f32.mrb[0].mxu0
    %995 = vdwg.mxu0
    %v996 = vadd.f32 %v884, %v978
    %v997 = vadd.f32 %v885, %v983
    %v998 = vadd.f32 %v886, %v988
    %v999 = vadd.f32 %v887, %v993
    %v1000 = vmul.f32 %v996, 0.5
    %v1001 = vmul.f32 %v997, 0.5
    %v1002 = vmul.f32 %v998, 0.5
    %v1003 = vmul.f32 %v999, 0.5
    %v1004 = vmul.f32 %v996, 0.70710677
    %v1005 = vmul.f32 %v997, 0.70710677
    %v1006 = vmul.f32 %v998, 0.70710677
    %v1007 = vmul.f32 %v999, 0.70710677
    %v1008 = verf.f32.pop %v1004
    %v1009 = verf.f32.pop %v1005
    %v1010 = verf.f32.pop %v1006
    %v1011 = verf.f32.pop %v1007
    %v1012 = vadd.f32 %v1008, 1.0
    %v1013 = vadd.f32 %v1009, 1.0
    %v1014 = vadd.f32 %v1010, 1.0
    %v1015 = vadd.f32 %v1011, 1.0
    %v1016 = vmul.f32 %v1000, %v1012
    %v1017 = vmul.f32 %v1001, %v1013
    %v1018 = vmul.f32 %v1002, %v1014
    %v1019 = vmul.f32 %v1003, %v1015
    %v1020 = vld [vmem:[%s4 + $0x2] sm:$0x1]
    %v1025 = vrot.slane %v1016, 7
    %v1026 = vrot.slane %v1017, 7
    %v1027 = vsel %vm47, %v1025, %v1026
    %v1028 = vrot.slane %v1018, 7
    %v1029 = vrot.slane %v1019, 7
    %v1030 = vsel %vm47, %v1028, %v1029
    %v1037 = vsel %vm47, 0.0, %v1025
    %v1038 = vsel %vm47, 0.0, %v1028
    %v1039 = vsel %vm47, %v1026, 0.0
    %v1040 = vsel %vm47, %v1029, 0.0
    %v1041 = vlaneseq
    %v1042 = vshrl.u32 %v1041, 7
    %v1043 = vsub.s32 0, %v1042
    %v1044 = vrot.slane %v1020, %v1043
    %v1045 = vadd.f32 %v1044, 0.0
    %v1046 = vld [vmem:[%s3] sm:$0x1]
    %v1047 = vlaneseq
    %v1048 = vshrl.u32 %v1047, 7
    %v1049 = vsub.s32 0, %v1048
    %v1050 = vrot.slane %v1046, %v1049
    %v1051 = vmul.f32 %v1037, %v1050
    %v1052 = vmul.f32 %v1027, %v1050
    %v1053 = vmul.f32 %v1038, %v1050
    %v1054 = vmul.f32 %v1030, %v1050
    %v1055 = vadd.f32 %v1045, %v1051
    %v1056 = vadd.f32 %v1045, %v1052
    %v1057 = vadd.f32 %v1045, %v1053
    %v1058 = vadd.f32 %v1045, %v1054
    %v1059 = vld [vmem:[%s3 + $0x1] sm:$0x1]
    %v1060 = vlaneseq
    %v1061 = vshrl.u32 %v1060, 7
    %v1062 = vsub.s32 0, %v1061
    %v1063 = vrot.slane %v1059, %v1062
    %v1064 = vmul.f32 %v1037, %v1063
    %v1065 = vmul.f32 %v1027, %v1063
    %v1066 = vmul.f32 %v1039, %v1063
    %v1067 = vmul.f32 %v1038, %v1063
    %v1068 = vmul.f32 %v1030, %v1063
    %v1069 = vmul.f32 %v1040, %v1063
    %v1076 = vrot.slane %v1064, 1
    %v1077 = vrot.slane %v1065, 1
    %v1078 = vsel %vm174, %v1076, %v1077
    %v1079 = vrot.slane %v1066, 1
    %v1080 = vsel %vm174, %v1077, %v1079
    %v1081 = vrot.slane %v1067, 1
    %v1082 = vrot.slane %v1068, 1
    %v1083 = vsel %vm174, %v1081, %v1082
    %v1084 = vrot.slane %v1069, 1
    %v1085 = vsel %vm174, %v1082, %v1084
    %v1090 = vadd.f32 %v1055, %v1078
    %v1091 = vadd.f32 %v1056, %v1080
    %v1092 = vadd.f32 %v1057, %v1083
    %v1093 = vadd.f32 %v1058, %v1085
    %v1094 = vld [vmem:[%s3 + $0x2] sm:$0x1]
    %v1095 = vlaneseq
    %v1096 = vshrl.u32 %v1095, 7
    %v1097 = vsub.s32 0, %v1096
    %v1098 = vrot.slane %v1094, %v1097
    %v1099 = vmul.f32 %v1037, %v1098
    %v1100 = vmul.f32 %v1027, %v1098
    %v1101 = vmul.f32 %v1039, %v1098
    %v1102 = vmul.f32 %v1038, %v1098
    %v1103 = vmul.f32 %v1030, %v1098
    %v1104 = vmul.f32 %v1040, %v1098
    %v1111 = vrot.slane %v1099, 2
    %v1112 = vrot.slane %v1100, 2
    %v1113 = vsel %vm287, %v1111, %v1112
    %v1114 = vrot.slane %v1101, 2
    %v1115 = vsel %vm287, %v1112, %v1114
    %v1116 = vrot.slane %v1102, 2
    %v1117 = vrot.slane %v1103, 2
    %v1118 = vsel %vm287, %v1116, %v1117
    %v1119 = vrot.slane %v1104, 2
    %v1120 = vsel %vm287, %v1117, %v1119
    %v1125 = vadd.f32 %v1090, %v1113
    %v1126 = vadd.f32 %v1091, %v1115
    %v1127 = vadd.f32 %v1092, %v1118
    %v1128 = vadd.f32 %v1093, %v1120
    %v1129 = vmul.f32 %v1125, 0.5
    %v1130 = vmul.f32 %v1126, 0.5
    %v1131 = vmul.f32 %v1127, 0.5
    %v1132 = vmul.f32 %v1128, 0.5
    %v1133 = vmul.f32 %v1125, 0.70710677
    %v1134 = vmul.f32 %v1126, 0.70710677
    %v1135 = vmul.f32 %v1127, 0.70710677
    %v1136 = vmul.f32 %v1128, 0.70710677
    %v1137 = verf.f32.pop %v1133
    %v1138 = verf.f32.pop %v1134
    %v1139 = verf.f32.pop %v1135
    %v1140 = verf.f32.pop %v1136
    %v1141 = vadd.f32 %v1137, 1.0
    %v1142 = vadd.f32 %v1138, 1.0
    %v1143 = vadd.f32 %v1139, 1.0
    %v1144 = vadd.f32 %v1140, 1.0
    %v1145 = vmul.f32 %v1129, %v1141
    %v1146 = vmul.f32 %v1130, %v1142
    %v1147 = vmul.f32 %v1131, %v1143
    %v1148 = vmul.f32 %v1132, %v1144
    %v1149 = vld [vmem:[%s5] sm:$0xff]
    %v1150 = vld [vmem:[%s5 + $0x8] sm:$0xff]
    %v1151 = vadd.f32 %v1145, %v1149
    %v1152 = vadd.f32 %v1146, %v1150
    %v1153 = vadd.f32 %v1147, %v1149
    %v1154 = vadd.f32 %v1148, %v1150
    %v1155 = vmul.f32 %v1151, %v1151
    %v1156 = vmul.f32 %v1152, %v1152
    %v1157 = vmul.f32 %v1153, %v1153
    %v1158 = vmul.f32 %v1154, %v1154
    %v1159 = vsel %vm449, %v1155, 0.0
    %1160 = vadd.xlane.f32.xlu0 %v1159
    %v1161 = vpop.xlane.xlu0 %1160
    %v1162 = vsel %vm449, %v1156, 0.0
    %1163 = vadd.xlane.f32.xlu0 %v1162
    %v1164 = vpop.xlane.xlu0 %1163
    %v1165 = vsel %vm449, %v1157, 0.0
    %1166 = vadd.xlane.f32.xlu0 %v1165
    %v1167 = vpop.xlane.xlu0 %1166
    %v1168 = vsel %vm449, %v1158, 0.0
    %1169 = vadd.xlane.f32.xlu0 %v1168
    %v1170 = vpop.xlane.xlu0 %1169
    %v1171 = vrcp.pop 32.0
    %v1172 = vmul.f32 %v1161, %v1171
    %v1173 = vmul.f32 %v1164, %v1171
    %v1174 = vmul.f32 %v1167, %v1171
    %v1175 = vmul.f32 %v1170, %v1171
    %v1176 = vadd.f32 %v1172, 1e-08
    %v1177 = vadd.f32 %v1173, 1e-08
    %v1178 = vadd.f32 %v1174, 1e-08
    %v1179 = vadd.f32 %v1175, 1e-08
    %v1180 = vrsqrt.pop %v1176
    %v1181 = vrsqrt.pop %v1177
    %v1182 = vrsqrt.pop %v1178
    %v1183 = vrsqrt.pop %v1179
    %v1184 = vmul.f32 %v1151, %v1180
    %v1185 = vmul.f32 %v1152, %v1181
    %v1186 = vmul.f32 %v1153, %v1182
    %v1187 = vmul.f32 %v1154, %v1183
    %1188 = vst.msk [vmem:[#allocation5] sm:$0xff] %vm449, %v1184
    %1189 = vst.msk [vmem:[#allocation5 + $0x8] sm:$0xff] %vm449, %v1185
    %1190 = vst.msk [vmem:[#allocation5 + $0x10] sm:$0xff] %vm449, %v1186
    %1191 = vst.msk [vmem:[#allocation5 + $0x18] sm:$0xff] %vm449, %v1187
    // Predicated region
    $region30: #{tpu_custom_call.1} parent=1 // pred_check
      _
    $region31: #{tpu_custom_call.1} parent=1 // pred_check_branch
      %1193 = sbr.rel (0) target = $region33
    $region32: #{tpu_custom_call.1} parent=1 // pred_region
      %s1195 = ssub.s32 512, 512
      %1196 = vsyncadd [#allocation4], %s1195
      %s1197 = sshll.u32 [#allocation5], 4
      %s1198 = int_to_ptr.vmem [resolvable:$true] %s1197
      %1203 = dma.vmem_to_hbm [thread:$0]  %s1198, 512, %s6, [#allocation4], 128, 128, 8
    $region33: #{tpu_custom_call.1} parent=1 // pred_fallthru
      _
    // Predicated region
    $region34: #{tpu_custom_call.1} parent=1 // pred_check
      _
    $region35: #{tpu_custom_call.1} parent=1 // pred_check_branch
      %1205 = sbr.rel (0) target = $region37
    $region36: #{tpu_custom_call.1} parent=1 // pred_region
      %1206 = dma.done [#allocation4], 512
    $region37: #{tpu_custom_call.1} parent=1 // pred_fallthru
      _
    %1207 = vsyncpa [#allocation3], 1
    %1208 = vsyncpa [#allocation4], 1

</llo_original>
